<compile_context>
chip_gen: v5e
topology: v5e:2x2
jax: 0.10.0
libtpu: 0.0.40
codegen_flags: <defaults>
</compile_context>

<pallas_src>
import functools

import jax
import jax.numpy as jnp
from jax import lax
from jax.experimental import pallas as pl
from jax.experimental.pallas import tpu as pltpu

_LANES = 128            # lane width of a vreg; the batch axis maps here
_CHUNK = 8              # sublane rows per inner-loop iteration (one f32 vreg per component)
_MAX_BLOCK_ROWS = 256   # 256 rows * 128 lanes = 32K rotations / step; 6.3 MiB double-buffered
_MIN_PROGRAMS = 8       # >=4 grid steps per TensorCore on v7x -> pipelined prefetch/writeback


def cumulative_integral(values: jnp.ndarray, delta_t: float = 1.0) -> jnp.ndarray:
    """JAX port of loopgen's cumulative_integral (trapezoid over lower-triangular rows)."""
    n = values.shape[0]
    scaled = values * (delta_t / n)
    mat = jnp.tril(jnp.broadcast_to(scaled, (n, n)))
    # torch.trapezoid(..., dim=-1) with dx=1:
    return 0.5 * jnp.sum(mat[:, 1:] + mat[:, :-1], axis=-1)


def _so3_reverse_kernel(coef_ref, rot_ref, score_ref, noise_ref, out_ref, *,
                        n_chunks, unroll):
    """coef: SMEM (2,) = [c1, c2]; rot/out: (9, R, 128); score/noise: (3, R, 128)."""
    # Hoisted scalar->vector broadcasts (JAX does not CSE broadcast_in_dim).
    c1v = jnp.full((_CHUNK, _LANES), coef_ref[0], dtype=jnp.float32)
    c2v = jnp.full((_CHUNK, _LANES), coef_ref[1], dtype=jnp.float32)

    def chunk_body(ci, carry):
        start = pl.multiple_of(ci * _CHUNK, _CHUNK)
        rows = pl.ds(start, _CHUNK)

        # Euler-Maruyama tangent update v = c1*score + c2*noise, per component (8, 128)
        vx = c1v * score_ref[0, rows, :] + c2v * noise_ref[0, rows, :]
        vy = c1v * score_ref[1, rows, :] + c2v * noise_ref[1, rows, :]
        vz = c1v * score_ref[2, rows, :] + c2v * noise_ref[2, rows, :]

        xx = vx * vx
        yy = vy * vy
        zz = vz * vz
        xy = vx * vy
        xz = vx * vz
        yz = vy * vz

        # Rodrigues / so3_exp_map (pytorch3d: clamp squared norm at eps=1e-4)
        nrm2 = jnp.maximum(xx + yy + zz, 1e-4)
        inv = lax.rsqrt(nrm2)                          # 1/theta        (EUP)
        theta = nrm2 * inv                             # sqrt(nrm2)
        fac1 = inv * jnp.sin(theta)                    # sin(t)/t
        fac2 = (inv * inv) * (1.0 - jnp.cos(theta))    # (1 - cos(t))/t^2

        f1x = fac1 * vx
        f1y = fac1 * vy
        f1z = fac1 * vz
        f2xy = fac2 * xy
        f2xz = fac2 * xz
        f2yz = fac2 * yz

        # U = I + fac1*K + fac2*K^2,  K = hat(v) = [[0,-z,y],[z,0,-x],[-y,x,0]]
        u00 = 1.0 - fac2 * (yy + zz)
        u11 = 1.0 - fac2 * (xx + zz)
        u22 = 1.0 - fac2 * (xx + yy)
        u01 = f2xy - f1z
        u10 = f2xy + f1z
        u02 = f2xz + f1y
        u20 = f2xz - f1y
        u12 = f2yz - f1x
        u21 = f2yz + f1x

        # out[i, j] = sum_k R[i, k] * U[k, j]  (batched 3x3 matmul, lane-parallel FMAs)
        for i in range(3):
            ri0 = rot_ref[3 * i + 0, rows, :]
            ri1 = rot_ref[3 * i + 1, rows, :]
            ri2 = rot_ref[3 * i + 2, rows, :]
            out_ref[3 * i + 0, rows, :] = ri0 * u00 + ri1 * u10 + ri2 * u20
            out_ref[3 * i + 1, rows, :] = ri0 * u01 + ri1 * u11 + ri2 * u21
            out_ref[3 * i + 2, rows, :] = ri0 * u02 + ri1 * u12 + ri2 * u22
        return carry

    # Partial unroll: enough ILP for the LLO scheduler, bounded live-vreg set, small
    # scheduled region.  (Kernel is HBM-bound; more unrolling buys nothing.)
    lax.fori_loop(0, n_chunks, chunk_body, 0, unroll=unroll)


def so3_reverse_soa(coef, rot9, score3, noise3, *, block_rows):
    """SoA entry point (no layout conversion): rot9 (9, rows, 128), score3/noise3 (3, rows, 128).

    `rows` must be a multiple of `block_rows` (itself a multiple of 8).  The rotation
    input is aliased onto the output (operand 1 -> output 0): a diffusion sampling loop
    that keeps its state in this layout updates rotations in place across time steps,
    and must not reuse the donated input buffer.
    """
    _, rows, lanes = rot9.shape
    assert lanes == _LANES
    assert block_rows % _CHUNK == 0 and rows % block_rows == 0

    n_chunks = block_rows // _CHUNK
    kernel = functools.partial(_so3_reverse_kernel, n_chunks=n_chunks,
                               unroll=min(4, n_chunks))

    # 15 input + 9 output f32 components per lane-row of 128 rotations.
    bytes_per_row = 24 * _LANES * 4
    cost = pl.CostEstimate(
        flops=90 * rows * _LANES,               # ~90 VPU flops / rotation
        transcendentals=3 * rows * _LANES,      # rsqrt + sin + cos / rotation
        bytes_accessed=bytes_per_row * rows,
    )
    # Double-buffered footprint (all operands + output) plus generous headroom;
    # 32 MiB is safe on every generation (v5e/v6e physical 128 MiB, v7x 64 MiB).
    vmem_bytes = max(2 * bytes_per_row * block_rows + (4 << 20), 32 << 20)

    return pl.pallas_call(
        kernel,
        out_shape=jax.ShapeDtypeStruct((9, rows, _LANES), jnp.float32),
        grid=(rows // block_rows,),
        in_specs=[
            pl.BlockSpec(memory_space=pltpu.SMEM),                       # [c1, c2] scalars
            pl.BlockSpec((9, block_rows, _LANES), lambda i: (0, i, 0)),  # rotations
            pl.BlockSpec((3, block_rows, _LANES), lambda i: (0, i, 0)),  # score
            pl.BlockSpec((3, block_rows, _LANES), lambda i: (0, i, 0)),  # noise
        ],
        out_specs=pl.BlockSpec((9, block_rows, _LANES), lambda i: (0, i, 0)),
        input_output_aliases={1: 0},   # in-place rotation update (P8); rot9 is donated
        cost_estimate=cost,
        compiler_params=pltpu.CompilerParams(
            dimension_semantics=("parallel",),
            vmem_limit_bytes=int(vmem_bytes)),
    )(coef, rot9, score3, noise3)


def _cdiv(a, b):
    return -(-a // b)


def _round_up(x, m):
    return ((x + m - 1) // m) * m


def _pack_soa(x2d, n_pad):
    """(n, C) -> (C, n_pad // 128, 128), zero-padded along the batch axis."""
    n, c = x2d.shape
    x2d = jnp.pad(x2d.astype(jnp.float32), ((0, n_pad - n), (0, 0)))
    return x2d.T.reshape(c, n_pad // _LANES, _LANES)


@functools.partial(jax.jit,
                   static_argnames=("time_step", "noise_scale", "max_block_rows"))
def so3_reverse_process(current_rotations, score, noise, beta_schedule,
                        time_step: int, noise_scale: float = 0.2,
                        max_block_rows: int = _MAX_BLOCK_ROWS):
    """current_rotations: (N, 3, 3); score, noise: (N, 3). Returns (N, 3, 3).

    Convenience wrapper matching the PyTorch module layout; it converts to the
    lane-dense SoA layout once.  A loop over many time steps should keep its state in
    the SoA layout and call `so3_reverse_soa` directly (no transposes, in-place update).
    """
    n = score.shape[0]
    num_steps = beta_schedule.shape[0]
    if not 1 <= time_step < num_steps:
        raise ValueError("time_step must be in [1, len(beta_schedule)); "
                         "time_step=0 would wrap around the variance schedule")

    # Scalar Euler-Maruyama coefficients.
    dt = 1.0 / num_steps
    var = cumulative_integral(beta_schedule)                  # Var[x_t | x_0] schedule
    g2 = (var[time_step] - var[time_step - 1]) / dt           # g(t)^2
    c1 = g2 * dt * 2.0                                        # multiplies the score
    c2 = jnp.sqrt(g2) * jnp.sqrt(jnp.float32(dt)) * noise_scale   # multiplies the noise
    coef = jnp.stack([c1, c2]).astype(jnp.float32)

    # Block-size / grid heuristic:
    #   * target >= _MIN_PROGRAMS grid programs when the batch allows it (>=4 pipelined
    #     steps per v7x TensorCore, good double-buffer overlap on v5e/v6e),
    #   * cap the block at max_block_rows sublane-rows (VMEM-safe on every generation),
    #   * derive the block from the program count so padding stays <8 rows per program.
    rows = _cdiv(max(n, 1), _LANES)
    p_target = max(_MIN_PROGRAMS, _cdiv(rows, max_block_rows))
    bt = min(_round_up(max_block_rows, _CHUNK),
             max(_CHUNK, _round_up(_cdiv(rows, p_target), _CHUNK)))
    rows_pad = _round_up(rows, bt)
    n_pad = rows_pad * _LANES

    rot9 = _pack_soa(current_rotations.reshape(n, 9), n_pad)   # (9, rows_pad, 128)
    score3 = _pack_soa(score, n_pad)                           # (3, rows_pad, 128)
    noise3 = _pack_soa(noise, n_pad)                           # (3, rows_pad, 128)

    out9 = so3_reverse_soa(coef, rot9, score3, noise3, block_rows=bt)
    return out9.reshape(9, n_pad).T[:n].reshape(n, 3, 3)


def _reference(current_rotations, score, noise, beta_schedule, time_step, noise_scale=0.2):
    """Pure-JAX reference mirroring the PyTorch forward (for validation)."""
    num_steps = beta_schedule.shape[0]
    dt = 1.0 / num_steps
    var = cumulative_integral(beta_schedule)
    g_t = jnp.sqrt((var[time_step] - var[time_step - 1]) / dt)
    v = g_t**2 * score * dt * 2.0 + g_t * jnp.sqrt(jnp.float32(dt)) * noise_scale * noise
    nrm2 = jnp.maximum(jnp.sum(v * v, axis=-1), 1e-4)
    theta = jnp.sqrt(nrm2)
    fac1 = (jnp.sin(theta) / theta)[:, None, None]
    fac2 = ((1.0 - jnp.cos(theta)) / nrm2)[:, None, None]
    x, y, z = v[:, 0], v[:, 1], v[:, 2]
    zero = jnp.zeros_like(x)
    K = jnp.stack([
        jnp.stack([zero, -z, y], axis=-1),
        jnp.stack([z, zero, -x], axis=-1),
        jnp.stack([-y, x, zero], axis=-1),
    ], axis=-2)
    U = jnp.eye(3, dtype=v.dtype) + fac1 * K + fac2 * jnp.einsum(
        "nij,njk->nik", K, K, precision="highest")
    return jnp.einsum("nij,njk->nik", current_rotations, U, precision="highest")


if __name__ == "__main__":
    key = jax.random.PRNGKey(0)

    T_STEPS = 100
    TIME_STEP = 50
    NOISE_SCALE = 0.2
    beta_schedule = jnp.linspace(0.01, 1.0, T_STEPS, dtype=jnp.float32)

    def make_inputs(n, k):
        k_rot, k_score, k_noise = jax.random.split(k, 3)
        raw = jax.random.normal(k_rot, (n, 3, 3), dtype=jnp.float32)
        q, r = jnp.linalg.qr(raw)
        rot = q * jnp.sign(jnp.diagonal(r, axis1=-2, axis2=-1))[:, None, :]
        score = jax.random.normal(k_score, (n, 3), dtype=jnp.float32)
        noise = jax.random.normal(k_noise, (n, 3), dtype=jnp.float32)  # tangent gaussian
        return rot, score, noise

    # tiny batch (single program); mid batch (multi-program, multi-chunk blocks);
    # non-multiple-of-128 batch exercising the padding / tail path + >=8 programs.
    for n in (256, 2560, 14500):
        rot, score, noise = make_inputs(n, jax.random.fold_in(key, n))
        out = so3_reverse_process(rot, score, noise, beta_schedule,
                                  time_step=TIME_STEP, noise_scale=NOISE_SCALE)
        out = jax.block_until_ready(out)
        ref = _reference(rot, score, noise, beta_schedule, TIME_STEP, NOISE_SCALE)
        assert out.shape == (n, 3, 3)
        max_err = float(jnp.max(jnp.abs(out - ref)))
        assert max_err < 3e-5, (n, max_err)

    print("KERNEL_OK")
</pallas_src>

<mosaic_0001>
module attributes {stable_mosaic.version = 11 : i64} {
  func.func @_so3_reverse_kernel(%arg0: i32, %arg1: memref<2xf32, #tpu.memory_space<smem>>, %arg2: memref<9x8x128xf32, #tpu.memory_space<vmem>>, %arg3: memref<3x8x128xf32, #tpu.memory_space<vmem>>, %arg4: memref<3x8x128xf32, #tpu.memory_space<vmem>>, %arg5: memref<9x8x128xf32, #tpu.memory_space<vmem>>) attributes {dimension_semantics = [#tpu.dimension_semantics<parallel>], iteration_bounds = array<i64: 1>, scalar_prefetch = 0 : i64, scratch_operands = 0 : i64, tpu.core_type = #tpu.core_type<tc>, window_params = [{transform_indices = @transform_0, window_bounds = array<i64: 2>}, {transform_indices = @transform_1, window_bounds = array<i64: 9, 8, 128>}, {transform_indices = @transform_2, window_bounds = array<i64: 3, 8, 128>}, {transform_indices = @transform_3, window_bounds = array<i64: 3, 8, 128>}, {transform_indices = @transform_4, window_bounds = array<i64: 9, 8, 128>}]} {
    %c0 = arith.constant 0 : index
    %0 = memref.load %arg1[%c0] : memref<2xf32, #tpu.memory_space<smem>>
    %1 = vector.broadcast %0 : f32 to vector<8x128xf32>
    %c1 = arith.constant 1 : index
    %2 = memref.load %arg1[%c1] : memref<2xf32, #tpu.memory_space<smem>>
    %3 = vector.broadcast %2 : f32 to vector<8x128xf32>
    %c0_i32 = arith.constant 0 : i32
    %c8_i32 = arith.constant 8 : i32
    %4 = arith.muli %c0_i32, %c8_i32 : i32
    %5 = tpu.assume_multiple %4, 8 : i32
    %c0_0 = arith.constant 0 : index
    %6 = arith.index_cast %5 : i32 to index
    %c0_1 = arith.constant 0 : index
    %7 = vector.load %arg3[%c0_0, %6, %c0_1] : memref<3x8x128xf32, #tpu.memory_space<vmem>>, vector<1x8x128xf32>
    %8 = vector.shape_cast %7 : vector<1x8x128xf32> to vector<8x128xf32>
    %9 = arith.mulf %1, %8 : vector<8x128xf32>
    %c0_2 = arith.constant 0 : index
    %10 = arith.index_cast %5 : i32 to index
    %c0_3 = arith.constant 0 : index
    %11 = vector.load %arg4[%c0_2, %10, %c0_3] : memref<3x8x128xf32, #tpu.memory_space<vmem>>, vector<1x8x128xf32>
    %12 = vector.shape_cast %11 : vector<1x8x128xf32> to vector<8x128xf32>
    %13 = arith.mulf %3, %12 : vector<8x128xf32>
    %14 = arith.addf %9, %13 : vector<8x128xf32>
    %c1_4 = arith.constant 1 : index
    %15 = arith.index_cast %5 : i32 to index
    %c0_5 = arith.constant 0 : index
    %16 = vector.load %arg3[%c1_4, %15, %c0_5] : memref<3x8x128xf32, #tpu.memory_space<vmem>>, vector<1x8x128xf32>
    %17 = vector.shape_cast %16 : vector<1x8x128xf32> to vector<8x128xf32>
    %18 = arith.mulf %1, %17 : vector<8x128xf32>
    %c1_6 = arith.constant 1 : index
    %19 = arith.index_cast %5 : i32 to index
    %c0_7 = arith.constant 0 : index
    %20 = vector.load %arg4[%c1_6, %19, %c0_7] : memref<3x8x128xf32, #tpu.memory_space<vmem>>, vector<1x8x128xf32>
    %21 = vector.shape_cast %20 : vector<1x8x128xf32> to vector<8x128xf32>
    %22 = arith.mulf %3, %21 : vector<8x128xf32>
    %23 = arith.addf %18, %22 : vector<8x128xf32>
    %c2 = arith.constant 2 : index
    %24 = arith.index_cast %5 : i32 to index
    %c0_8 = arith.constant 0 : index
    %25 = vector.load %arg3[%c2, %24, %c0_8] : memref<3x8x128xf32, #tpu.memory_space<vmem>>, vector<1x8x128xf32>
    %26 = vector.shape_cast %25 : vector<1x8x128xf32> to vector<8x128xf32>
    %27 = arith.mulf %1, %26 : vector<8x128xf32>
    %c2_9 = arith.constant 2 : index
    %28 = arith.index_cast %5 : i32 to index
    %c0_10 = arith.constant 0 : index
    %29 = vector.load %arg4[%c2_9, %28, %c0_10] : memref<3x8x128xf32, #tpu.memory_space<vmem>>, vector<1x8x128xf32>
    %30 = vector.shape_cast %29 : vector<1x8x128xf32> to vector<8x128xf32>
    %31 = arith.mulf %3, %30 : vector<8x128xf32>
    %32 = arith.addf %27, %31 : vector<8x128xf32>
    %33 = arith.mulf %14, %14 : vector<8x128xf32>
    %34 = arith.mulf %23, %23 : vector<8x128xf32>
    %35 = arith.mulf %32, %32 : vector<8x128xf32>
    %36 = arith.mulf %14, %23 : vector<8x128xf32>
    %37 = arith.mulf %14, %32 : vector<8x128xf32>
    %38 = arith.mulf %23, %32 : vector<8x128xf32>
    %39 = arith.addf %33, %34 : vector<8x128xf32>
    %40 = arith.addf %39, %35 : vector<8x128xf32>
    %cst = arith.constant 9.99999974E-5 : f32
    %41 = vector.broadcast %cst : f32 to vector<8x128xf32>
    %42 = arith.maximumf %40, %41 : vector<8x128xf32>
    %43 = math.rsqrt %42 : vector<8x128xf32>
    %44 = arith.mulf %42, %43 : vector<8x128xf32>
    %45 = math.sin %44 : vector<8x128xf32>
    %46 = arith.mulf %43, %45 : vector<8x128xf32>
    %47 = arith.mulf %43, %43 : vector<8x128xf32>
    %48 = math.cos %44 : vector<8x128xf32>
    %cst_11 = arith.constant 1.000000e+00 : f32
    %49 = vector.broadcast %cst_11 : f32 to vector<8x128xf32>
    %50 = arith.subf %49, %48 : vector<8x128xf32>
    %51 = arith.mulf %47, %50 : vector<8x128xf32>
    %52 = arith.mulf %46, %14 : vector<8x128xf32>
    %53 = arith.mulf %46, %23 : vector<8x128xf32>
    %54 = arith.mulf %46, %32 : vector<8x128xf32>
    %55 = arith.mulf %51, %36 : vector<8x128xf32>
    %56 = arith.mulf %51, %37 : vector<8x128xf32>
    %57 = arith.mulf %51, %38 : vector<8x128xf32>
    %58 = arith.addf %34, %35 : vector<8x128xf32>
    %59 = arith.mulf %51, %58 : vector<8x128xf32>
    %cst_12 = arith.constant 1.000000e+00 : f32
    %60 = vector.broadcast %cst_12 : f32 to vector<8x128xf32>
    %61 = arith.subf %60, %59 : vector<8x128xf32>
    %62 = arith.addf %33, %35 : vector<8x128xf32>
    %63 = arith.mulf %51, %62 : vector<8x128xf32>
    %cst_13 = arith.constant 1.000000e+00 : f32
    %64 = vector.broadcast %cst_13 : f32 to vector<8x128xf32>
    %65 = arith.subf %64, %63 : vector<8x128xf32>
    %66 = arith.addf %33, %34 : vector<8x128xf32>
    %67 = arith.mulf %51, %66 : vector<8x128xf32>
    %cst_14 = arith.constant 1.000000e+00 : f32
    %68 = vector.broadcast %cst_14 : f32 to vector<8x128xf32>
    %69 = arith.subf %68, %67 : vector<8x128xf32>
    %70 = arith.subf %55, %54 : vector<8x128xf32>
    %71 = arith.addf %55, %54 : vector<8x128xf32>
    %72 = arith.addf %56, %53 : vector<8x128xf32>
    %73 = arith.subf %56, %53 : vector<8x128xf32>
    %74 = arith.subf %57, %52 : vector<8x128xf32>
    %75 = arith.addf %57, %52 : vector<8x128xf32>
    %c0_15 = arith.constant 0 : index
    %76 = arith.index_cast %5 : i32 to index
    %c0_16 = arith.constant 0 : index
    %77 = vector.load %arg2[%c0_15, %76, %c0_16] : memref<9x8x128xf32, #tpu.memory_space<vmem>>, vector<1x8x128xf32>
    %78 = vector.shape_cast %77 : vector<1x8x128xf32> to vector<8x128xf32>
    %c1_17 = arith.constant 1 : index
    %79 = arith.index_cast %5 : i32 to index
    %c0_18 = arith.constant 0 : index
    %80 = vector.load %arg2[%c1_17, %79, %c0_18] : memref<9x8x128xf32, #tpu.memory_space<vmem>>, vector<1x8x128xf32>
    %81 = vector.shape_cast %80 : vector<1x8x128xf32> to vector<8x128xf32>
    %c2_19 = arith.constant 2 : index
    %82 = arith.index_cast %5 : i32 to index
    %c0_20 = arith.constant 0 : index
    %83 = vector.load %arg2[%c2_19, %82, %c0_20] : memref<9x8x128xf32, #tpu.memory_space<vmem>>, vector<1x8x128xf32>
    %84 = vector.shape_cast %83 : vector<1x8x128xf32> to vector<8x128xf32>
    %85 = arith.mulf %78, %61 : vector<8x128xf32>
    %86 = arith.mulf %81, %71 : vector<8x128xf32>
    %87 = arith.addf %85, %86 : vector<8x128xf32>
    %88 = arith.mulf %84, %73 : vector<8x128xf32>
    %89 = arith.addf %87, %88 : vector<8x128xf32>
    %c0_21 = arith.constant 0 : index
    %90 = arith.index_cast %5 : i32 to index
    %c0_22 = arith.constant 0 : index
    %91 = vector.load %arg5[%c0_21, %90, %c0_22] : memref<9x8x128xf32, #tpu.memory_space<vmem>>, vector<1x8x128xf32>
    %92 = vector.shape_cast %91 : vector<1x8x128xf32> to vector<8x128xf32>
    %93 = vector.shape_cast %89 : vector<8x128xf32> to vector<1x8x128xf32>
    tpu.vector_store %arg5[%c0_21, %90, %c0_22], %93 {strides = array<i32>} : memref<9x8x128xf32, #tpu.memory_space<vmem>>, vector<1x8x128xf32>,
    %94 = arith.mulf %78, %70 : vector<8x128xf32>
    %95 = arith.mulf %81, %65 : vector<8x128xf32>
    %96 = arith.addf %94, %95 : vector<8x128xf32>
    %97 = arith.mulf %84, %75 : vector<8x128xf32>
    %98 = arith.addf %96, %97 : vector<8x128xf32>
    %c1_23 = arith.constant 1 : index
    %99 = arith.index_cast %5 : i32 to index
    %c0_24 = arith.constant 0 : index
    %100 = vector.load %arg5[%c1_23, %99, %c0_24] : memref<9x8x128xf32, #tpu.memory_space<vmem>>, vector<1x8x128xf32>
    %101 = vector.shape_cast %100 : vector<1x8x128xf32> to vector<8x128xf32>
    %102 = vector.shape_cast %98 : vector<8x128xf32> to vector<1x8x128xf32>
    tpu.vector_store %arg5[%c1_23, %99, %c0_24], %102 {strides = array<i32>} : memref<9x8x128xf32, #tpu.memory_space<vmem>>, vector<1x8x128xf32>,
    %103 = arith.mulf %78, %72 : vector<8x128xf32>
    %104 = arith.mulf %81, %74 : vector<8x128xf32>
    %105 = arith.addf %103, %104 : vector<8x128xf32>
    %106 = arith.mulf %84, %69 : vector<8x128xf32>
    %107 = arith.addf %105, %106 : vector<8x128xf32>
    %c2_25 = arith.constant 2 : index
    %108 = arith.index_cast %5 : i32 to index
    %c0_26 = arith.constant 0 : index
    %109 = vector.load %arg5[%c2_25, %108, %c0_26] : memref<9x8x128xf32, #tpu.memory_space<vmem>>, vector<1x8x128xf32>
    %110 = vector.shape_cast %109 : vector<1x8x128xf32> to vector<8x128xf32>
    %111 = vector.shape_cast %107 : vector<8x128xf32> to vector<1x8x128xf32>
    tpu.vector_store %arg5[%c2_25, %108, %c0_26], %111 {strides = array<i32>} : memref<9x8x128xf32, #tpu.memory_space<vmem>>, vector<1x8x128xf32>,
    %c3 = arith.constant 3 : index
    %112 = arith.index_cast %5 : i32 to index
    %c0_27 = arith.constant 0 : index
    %113 = vector.load %arg2[%c3, %112, %c0_27] : memref<9x8x128xf32, #tpu.memory_space<vmem>>, vector<1x8x128xf32>
    %114 = vector.shape_cast %113 : vector<1x8x128xf32> to vector<8x128xf32>
    %c4 = arith.constant 4 : index
    %115 = arith.index_cast %5 : i32 to index
    %c0_28 = arith.constant 0 : index
    %116 = vector.load %arg2[%c4, %115, %c0_28] : memref<9x8x128xf32, #tpu.memory_space<vmem>>, vector<1x8x128xf32>
    %117 = vector.shape_cast %116 : vector<1x8x128xf32> to vector<8x128xf32>
    %c5 = arith.constant 5 : index
    %118 = arith.index_cast %5 : i32 to index
    %c0_29 = arith.constant 0 : index
    %119 = vector.load %arg2[%c5, %118, %c0_29] : memref<9x8x128xf32, #tpu.memory_space<vmem>>, vector<1x8x128xf32>
    %120 = vector.shape_cast %119 : vector<1x8x128xf32> to vector<8x128xf32>
    %121 = arith.mulf %114, %61 : vector<8x128xf32>
    %122 = arith.mulf %117, %71 : vector<8x128xf32>
    %123 = arith.addf %121, %122 : vector<8x128xf32>
    %124 = arith.mulf %120, %73 : vector<8x128xf32>
    %125 = arith.addf %123, %124 : vector<8x128xf32>
    %c3_30 = arith.constant 3 : index
    %126 = arith.index_cast %5 : i32 to index
    %c0_31 = arith.constant 0 : index
    %127 = vector.load %arg5[%c3_30, %126, %c0_31] : memref<9x8x128xf32, #tpu.memory_space<vmem>>, vector<1x8x128xf32>
    %128 = vector.shape_cast %127 : vector<1x8x128xf32> to vector<8x128xf32>
    %129 = vector.shape_cast %125 : vector<8x128xf32> to vector<1x8x128xf32>
    tpu.vector_store %arg5[%c3_30, %126, %c0_31], %129 {strides = array<i32>} : memref<9x8x128xf32, #tpu.memory_space<vmem>>, vector<1x8x128xf32>,
    %130 = arith.mulf %114, %70 : vector<8x128xf32>
    %131 = arith.mulf %117, %65 : vector<8x128xf32>
    %132 = arith.addf %130, %131 : vector<8x128xf32>
    %133 = arith.mulf %120, %75 : vector<8x128xf32>
    %134 = arith.addf %132, %133 : vector<8x128xf32>
    %c4_32 = arith.constant 4 : index
    %135 = arith.index_cast %5 : i32 to index
    %c0_33 = arith.constant 0 : index
    %136 = vector.load %arg5[%c4_32, %135, %c0_33] : memref<9x8x128xf32, #tpu.memory_space<vmem>>, vector<1x8x128xf32>
    %137 = vector.shape_cast %136 : vector<1x8x128xf32> to vector<8x128xf32>
    %138 = vector.shape_cast %134 : vector<8x128xf32> to vector<1x8x128xf32>
    tpu.vector_store %arg5[%c4_32, %135, %c0_33], %138 {strides = array<i32>} : memref<9x8x128xf32, #tpu.memory_space<vmem>>, vector<1x8x128xf32>,
    %139 = arith.mulf %114, %72 : vector<8x128xf32>
    %140 = arith.mulf %117, %74 : vector<8x128xf32>
    %141 = arith.addf %139, %140 : vector<8x128xf32>
    %142 = arith.mulf %120, %69 : vector<8x128xf32>
    %143 = arith.addf %141, %142 : vector<8x128xf32>
    %c5_34 = arith.constant 5 : index
    %144 = arith.index_cast %5 : i32 to index
    %c0_35 = arith.constant 0 : index
    %145 = vector.load %arg5[%c5_34, %144, %c0_35] : memref<9x8x128xf32, #tpu.memory_space<vmem>>, vector<1x8x128xf32>
    %146 = vector.shape_cast %145 : vector<1x8x128xf32> to vector<8x128xf32>
    %147 = vector.shape_cast %143 : vector<8x128xf32> to vector<1x8x128xf32>
    tpu.vector_store %arg5[%c5_34, %144, %c0_35], %147 {strides = array<i32>} : memref<9x8x128xf32, #tpu.memory_space<vmem>>, vector<1x8x128xf32>,
    %c6 = arith.constant 6 : index
    %148 = arith.index_cast %5 : i32 to index
    %c0_36 = arith.constant 0 : index
    %149 = vector.load %arg2[%c6, %148, %c0_36] : memref<9x8x128xf32, #tpu.memory_space<vmem>>, vector<1x8x128xf32>
    %150 = vector.shape_cast %149 : vector<1x8x128xf32> to vector<8x128xf32>
    %c7 = arith.constant 7 : index
    %151 = arith.index_cast %5 : i32 to index
    %c0_37 = arith.constant 0 : index
    %152 = vector.load %arg2[%c7, %151, %c0_37] : memref<9x8x128xf32, #tpu.memory_space<vmem>>, vector<1x8x128xf32>
    %153 = vector.shape_cast %152 : vector<1x8x128xf32> to vector<8x128xf32>
    %c8 = arith.constant 8 : index
    %154 = arith.index_cast %5 : i32 to index
    %c0_38 = arith.constant 0 : index
    %155 = vector.load %arg2[%c8, %154, %c0_38] : memref<9x8x128xf32, #tpu.memory_space<vmem>>, vector<1x8x128xf32>
    %156 = vector.shape_cast %155 : vector<1x8x128xf32> to vector<8x128xf32>
    %157 = arith.mulf %150, %61 : vector<8x128xf32>
    %158 = arith.mulf %153, %71 : vector<8x128xf32>
    %159 = arith.addf %157, %158 : vector<8x128xf32>
    %160 = arith.mulf %156, %73 : vector<8x128xf32>
    %161 = arith.addf %159, %160 : vector<8x128xf32>
    %c6_39 = arith.constant 6 : index
    %162 = arith.index_cast %5 : i32 to index
    %c0_40 = arith.constant 0 : index
    %163 = vector.load %arg5[%c6_39, %162, %c0_40] : memref<9x8x128xf32, #tpu.memory_space<vmem>>, vector<1x8x128xf32>
    %164 = vector.shape_cast %163 : vector<1x8x128xf32> to vector<8x128xf32>
    %165 = vector.shape_cast %161 : vector<8x128xf32> to vector<1x8x128xf32>
    tpu.vector_store %arg5[%c6_39, %162, %c0_40], %165 {strides = array<i32>} : memref<9x8x128xf32, #tpu.memory_space<vmem>>, vector<1x8x128xf32>,
    %166 = arith.mulf %150, %70 : vector<8x128xf32>
    %167 = arith.mulf %153, %65 : vector<8x128xf32>
    %168 = arith.addf %166, %167 : vector<8x128xf32>
    %169 = arith.mulf %156, %75 : vector<8x128xf32>
    %170 = arith.addf %168, %169 : vector<8x128xf32>
    %c7_41 = arith.constant 7 : index
    %171 = arith.index_cast %5 : i32 to index
    %c0_42 = arith.constant 0 : index
    %172 = vector.load %arg5[%c7_41, %171, %c0_42] : memref<9x8x128xf32, #tpu.memory_space<vmem>>, vector<1x8x128xf32>
    %173 = vector.shape_cast %172 : vector<1x8x128xf32> to vector<8x128xf32>
    %174 = vector.shape_cast %170 : vector<8x128xf32> to vector<1x8x128xf32>
    tpu.vector_store %arg5[%c7_41, %171, %c0_42], %174 {strides = array<i32>} : memref<9x8x128xf32, #tpu.memory_space<vmem>>, vector<1x8x128xf32>,
    %175 = arith.mulf %150, %72 : vector<8x128xf32>
    %176 = arith.mulf %153, %74 : vector<8x128xf32>
    %177 = arith.addf %175, %176 : vector<8x128xf32>
    %178 = arith.mulf %156, %69 : vector<8x128xf32>
    %179 = arith.addf %177, %178 : vector<8x128xf32>
    %c8_43 = arith.constant 8 : index
    %180 = arith.index_cast %5 : i32 to index
    %c0_44 = arith.constant 0 : index
    %181 = vector.load %arg5[%c8_43, %180, %c0_44] : memref<9x8x128xf32, #tpu.memory_space<vmem>>, vector<1x8x128xf32>
    %182 = vector.shape_cast %181 : vector<1x8x128xf32> to vector<8x128xf32>
    %183 = vector.shape_cast %179 : vector<8x128xf32> to vector<1x8x128xf32>
    tpu.vector_store %arg5[%c8_43, %180, %c0_44], %183 {strides = array<i32>} : memref<9x8x128xf32, #tpu.memory_space<vmem>>, vector<1x8x128xf32>,
    %c1_i32 = arith.constant 1 : i32
    return
  }
  func.func @transform_0(%arg0: i32) -> i32 {
    %c0_i32 = arith.constant 0 : i32
    %c0_i32_0 = arith.constant 0 : i32
    return %c0_i32 : i32
  }
  func.func @transform_1(%arg0: i32) -> (i32, i32, i32) {
    %c0_i32 = arith.constant 0 : i32
    %c0_i32_0 = arith.constant 0 : i32
    %c0_i32_1 = arith.constant 0 : i32
    return %c0_i32, %arg0, %c0_i32_0 : i32, i32, i32
  }
  func.func @transform_2(%arg0: i32) -> (i32, i32, i32) {
    %c0_i32 = arith.constant 0 : i32
    %c0_i32_0 = arith.constant 0 : i32
    %c0_i32_1 = arith.constant 0 : i32
    return %c0_i32, %arg0, %c0_i32_0 : i32, i32, i32
  }
  func.func @transform_3(%arg0: i32) -> (i32, i32, i32) {
    %c0_i32 = arith.constant 0 : i32
    %c0_i32_0 = arith.constant 0 : i32
    %c0_i32_1 = arith.constant 0 : i32
    return %c0_i32, %arg0, %c0_i32_0 : i32, i32, i32
  }
  func.func @transform_4(%arg0: i32) -> (i32, i32, i32) {
    %c0_i32 = arith.constant 0 : i32
    %c0_i32_0 = arith.constant 0 : i32
    %c0_i32_1 = arith.constant 0 : i32
    return %c0_i32, %arg0, %c0_i32_0 : i32, i32, i32
  }
}

</mosaic_0001>

<llo_original>
// kernel: so3_reverse_process.1
$region0: #{so3_reverse_process.1}
  #allocation0 [shape = 'u32[]', space=smem, size = 0x4, offset = 0x4, fixed_abs, tag = 'smem constant byte address 0x4 - core index']
  #allocation1 [shape = 'u32[72,128]{1,0:T(1,128)}', space=vmem, size = 0x9000, scoped, tag = 'internal scratch']
  %s0 = inlined_call_operand.vmem [shape: f32[2], index: 0, kind: input, shape index: {}]
  %s1 = inlined_call_operand.vmem [shape: f32[9,8,128], index: 1, kind: input, shape index: {}, may-alias: {1,4}]
  %s2 = inlined_call_operand.vmem [shape: f32[3,8,128], index: 2, kind: input, shape index: {}]
  %s3 = inlined_call_operand.vmem [shape: f32[3,8,128], index: 3, kind: input, shape index: {}]
  %s4 = inlined_call_operand.vmem [shape: f32[9,8,128], index: 4, kind: output, shape index: {}, may-alias: {1,4}]
  %s5 = sld [smem:[#allocation0]]
  $region30: #{so3_reverse_process.1} parent=0
    _
  %s7 = ssub.s32 1, %s5
  %s8 = scalar_select 0, %s7, %s5
  $region1: #{so3_reverse_process.1} parent=0
    #allocation2 [shape = 'u8[512]{0}', space=smem, size = 0x200, scoped, tag = 'input window, operand 0, single buffered']
    #allocation3 [shape = 's32[1]{0}', space=sflag, size = 0x4, scoped, tag = 'scoped memory for so3_reverse_process.1']
    %9 = vsyncpa [#allocation3], 0
    // Predicated region
    $region2: #{so3_reverse_process.1} parent=1 // pred_check
      _
    $region3: #{so3_reverse_process.1} parent=1 // pred_check_branch
      %11 = sbr.rel (0) target = $region5
    $region4: #{so3_reverse_process.1} parent=1 // pred_region
      %13 = vsyncadd [#allocation3], 0
      %s15 = sshll.u32 %s0, 4
      %s16 = int_to_ptr.vmem [resolvable:$true] %s15
      %18 = dma.vmem_to_smem %s16, 16, [#allocation2], [#allocation3]
    $region5: #{so3_reverse_process.1} parent=1 // pred_fallthru
      _
    // Predicated region
    $region6: #{so3_reverse_process.1} parent=1 // pred_check
      _
    $region7: #{so3_reverse_process.1} parent=1 // pred_check_branch
      %20 = sbr.rel (0) target = $region9
    $region8: #{so3_reverse_process.1} parent=1 // pred_region
      _
    $region9: #{so3_reverse_process.1} parent=1 // pred_fallthru
      _
    // Predicated region
    $region10: #{so3_reverse_process.1} parent=1 // pred_check
      _
    $region11: #{so3_reverse_process.1} parent=1 // pred_check_branch
      %22 = sbr.rel (0) target = $region13
    $region12: #{so3_reverse_process.1} parent=1 // pred_region
      _
    $region13: #{so3_reverse_process.1} parent=1 // pred_fallthru
      _
    // Predicated region
    $region14: #{so3_reverse_process.1} parent=1 // pred_check
      _
    $region15: #{so3_reverse_process.1} parent=1 // pred_check_branch
      %24 = sbr.rel (0) target = $region17
    $region16: #{so3_reverse_process.1} parent=1 // pred_region
      _
    $region17: #{so3_reverse_process.1} parent=1 // pred_fallthru
      _
    // Predicated region
    $region18: #{so3_reverse_process.1} parent=1 // pred_check
      _
    $region19: #{so3_reverse_process.1} parent=1 // pred_check_branch
      %26 = sbr.rel (0) target = $region21
    $region20: #{so3_reverse_process.1} parent=1 // pred_region
      %28 = dma.done [#allocation3], 16
    $region21: #{so3_reverse_process.1} parent=1 // pred_fallthru
      _
    %29 = sfence
    %s30 = sld [smem:[#allocation2]]
    %v31 = vstv %s30
    %s32 = sld [smem:[#allocation2 + $0x1]]
    %v33 = vstv %s32
    %v34 = vld [vmem:[%s2] sm:$0xff]
    %v35 = vmul.f32 %v31, %v34
    %v36 = vld [vmem:[%s3] sm:$0xff]
    %v37 = vmul.f32 %v33, %v36
    %v38 = vadd.f32 %v35, %v37
    %s39 = sadd.s32 0, 8
    %s40 = scalar_lea.vmem %s2, %s39
    %v41 = vld [vmem:[%s40] sm:$0xff]
    %v42 = vmul.f32 %v31, %v41
    %s43 = scalar_lea.vmem %s3, %s39
    %v44 = vld [vmem:[%s43] sm:$0xff]
    %v45 = vmul.f32 %v33, %v44
    %v46 = vadd.f32 %v42, %v45
    %s47 = sadd.s32 0, 16
    %s48 = scalar_lea.vmem %s2, %s47
    %v49 = vld [vmem:[%s48] sm:$0xff]
    %v50 = vmul.f32 %v31, %v49
    %s51 = scalar_lea.vmem %s3, %s47
    %v52 = vld [vmem:[%s51] sm:$0xff]
    %v53 = vmul.f32 %v33, %v52
    %v54 = vadd.f32 %v50, %v53
    %v55 = vmul.f32 %v38, %v38
    %v56 = vmul.f32 %v46, %v46
    %v57 = vmul.f32 %v54, %v54
    %v58 = vmul.f32 %v38, %v46
    %v59 = vmul.f32 %v38, %v54
    %v60 = vmul.f32 %v46, %v54
    %v61 = vadd.f32 %v55, %v56
    %v62 = vadd.f32 %v61, %v57
    %v63 = vmax.f32 %v62, 0.0001
    %v64 = vrsqrt.pop %v63
    %v65 = vmul.f32 %v64, %v63
    %v66 = vmul.f32 %v65, %v64
    %v67 = vmul.f32 0.5, %v66
    %v68 = vsub.f32 1.5, %v67
    %v69 = vmul.f32 %v64, %v68
    %vm70 = vweird.f32 %v63
    %vm71 = vweird.f32 %v64
    %vm72 = vmor %vm70, %vm71
    %v73 = vsel %vm72, %v64, %v69
    %v74 = vmul.f32 %v63, %v73
    %v75 = vand.u32 2147483647, %v74
    %vm76 = vcmp.le.f32.partialorder %v75, 0.7853982
    %vm77 = vcmp.lt.s32.totalorder %v74, 0
    %v78 = vand.u32 %v74, 2139095040
    %v79 = vshrl.u32 %v78, 23
    %v80 = vsub.s32 %v79, 127
    %v81 = vand.u32 2147483647, %v74
    %v82 = vand.u32 %v81, 8388607
    %v83 = vor.u32 %v82, 8388608
    %v84 = vsub.s32 0, %v83
    %v85 = vadd.s32 %v80, 1
    %vm86 = vcmp.gt.s32.totalorder %v85, 0
    %v87 = vsel %vm86, %v85, 0
    %v88 = vshrl.u32 %v87, 5
    %v89 = vand.u32 %v87, 31
    %v90 = vsub.s32 32, %v89
    %v91 = vshrl.u32 683565275, %v90
    %v92 = vshll.u32 683565275, %v89
    %v93 = vshrl.u32 2475754826, %v90
    %v94 = vor.u32 %v92, %v93
    %v95 = vshll.u32 2475754826, %v89
    %v96 = vshrl.u32 2131351028, %v90
    %v97 = vor.u32 %v95, %v96
    %v98 = vshll.u32 2131351028, %v89
    %v99 = vshrl.u32 2102212464, %v90
    %v100 = vor.u32 %v98, %v99
    %v101 = vshll.u32 2102212464, %v89
    %v102 = vshrl.u32 920167782, %v90
    %v103 = vor.u32 %v101, %v102
    %v104 = vshll.u32 920167782, %v89
    %v105 = vshrl.u32 1326507024, %v90
    %v106 = vor.u32 %v104, %v105
    %vm107 = vcmp.lt.s32.totalorder %v88, 1
    %vm108 = vcmp.lt.s32.totalorder %v88, 2
    %vm109 = vcmp.lt.s32.totalorder %v88, 3
    %vm110 = vcmp.lt.s32.totalorder %v88, 4
    %v111 = vsel %vm107, %v91, %v94
    %v112 = vsel %vm110, %v100, 2102212464
    %v113 = vsel %vm109, %v97, %v112
    %v114 = vsel %vm108, %v111, %v113
    %v115 = vsel %vm107, %v94, %v97
    %v116 = vsel %vm110, %v103, 920167782
    %v117 = vsel %vm109, %v100, %v116
    %v118 = vsel %vm108, %v115, %v117
    %v119 = vsel %vm107, %v97, %v100
    %v120 = vsel %vm110, %v106, 1326507024
    %v121 = vsel %vm109, %v103, %v120
    %v122 = vsel %vm108, %v119, %v121
    %v123 = vshll.u32 %v83, 8
    %v124 = vand.u32 %v123, 65535
    %v125 = vshrl.u32 %v123, 16
    %v126 = vand.u32 %v122, 65535
    %v127 = vshrl.u32 %v122, 16
    %v128 = vmul.u32 %v124, %v126
    %v129 = vmul.u32 %v124, %v127
    %v130 = vmul.u32 %v125, %v126
    %v131 = vmul.u32 %v125, %v127
    %v132 = vshll.u32 %v129, 16
    %v133 = vshrl.u32 %v129, 16
    %v134 = vshll.u32 %v130, 16
    %v135 = vshrl.u32 %v130, 16
    %vm136 = vc.u32 %v128, %v132
    %v137 = vsel %vm136, 1, 0
    %v138 = vadd.s32 %v128, %v132
    %v139 = vadd.s32 %v131, %v137
    %vm140 = vc.u32 %v138, %v134
    %v141 = vsel %vm140, 1, 0
    %v142 = vadd.s32 %v138, %v134
    %v143 = vadd.s32 %v139, %v141
    %v144 = vadd.s32 %v143, %v133
    %v145 = vadd.s32 %v144, %v135
    %v146 = vand.u32 %v123, 65535
    %v147 = vshrl.u32 %v123, 16
    %v148 = vand.u32 %v118, 65535
    %v149 = vshrl.u32 %v118, 16
    %v150 = vmul.u32 %v146, %v148
    %v151 = vmul.u32 %v146, %v149
    %v152 = vmul.u32 %v147, %v148
    %v153 = vmul.u32 %v147, %v149
    %v154 = vshll.u32 %v151, 16
    %v155 = vshrl.u32 %v151, 16
    %v156 = vshll.u32 %v152, 16
    %v157 = vshrl.u32 %v152, 16
    %vm158 = vc.u32 %v150, %v154
    %v159 = vsel %vm158, 1, 0
    %v160 = vadd.s32 %v150, %v154
    %v161 = vadd.s32 %v153, %v159
    %vm162 = vc.u32 %v160, %v156
    %v163 = vsel %vm162, 1, 0
    %v164 = vadd.s32 %v160, %v156
    %v165 = vadd.s32 %v161, %v163
    %v166 = vadd.s32 %v165, %v155
    %v167 = vadd.s32 %v166, %v157
    %v168 = vmul.u32 %v123, %v114
    %v169 = vadd.s32 %v145, %v164
    %vm170 = vc.u32 %v145, %v164
    %v171 = vadd.s32 %v167, 1
    %v172 = vsel %vm170, %v171, %v167
    %v173 = vadd.s32 %v168, %v172
    %v174 = vadd.s32 %v173, 536870912
    %v175 = vshrl.u32 %v174, 30
    %v176 = vshll.u32 %v175, 30
    %v177 = vsub.s32 %v173, %v176
    %vm178 = vcmp.lt.s32.totalorder %v177, 0
    %v179 = vsub.s32 0, %v177
    %v180 = vsel %vm178, %v179, %v177
    %v181 = vclz %v180
    %v182 = vsub.s32 %v181, 2
    %vm183 = vcmp.gt.s32.totalorder 0, %v182
    %v184 = vsel %vm183, 0, %v182
    %v185 = vsub.s32 32, %v184
    %v186 = vshll.u32 %v177, %v184
    %v187 = vshrl.u32 %v169, %v185
    %v188 = vor.u32 %v186, %v187
    %v189 = vsub.s32 4294967266, %v184
    %v190 = vadd.s32 %v189, 127
    %v191 = vshll.u32 %v190, 23
    %v192 = vor.u32 4788187, %v191
    %v193 = vand.u32 2147483647, %v192
    %v195 = vcvt.s32.f32 %v188
    %v196 = vmul.f32 %v195, %v193
    %v197 = vxor.u32 %v196, 2147483648
    %v198 = vsel %vm77, %v197, %v196
    %v199 = vsub.s32 4, %v175
    %v200 = vsel %vm77, %v199, %v175
    %v201 = vsel %vm76, %v74, %v198
    %v202 = vsel %vm76, 0, %v200
    %v203 = vmul.f32 %v201, %v201
    %v204 = vmul.f32 %v203, -0.001358992
    %v205 = vadd.f32 %v204, 0.041655596
    %v206 = vmul.f32 %v203, %v205
    %v207 = vadd.f32 %v206, -0.4999988
    %v208 = vmul.f32 %v203, %v207
    %v209 = vadd.f32 1.0, %v208
    %v210 = vmul.f32 %v201, %v201
    %v211 = vmul.f32 %v210, -0.00019511016
    %v212 = vadd.f32 %v211, 0.008332121
    %v213 = vmul.f32 %v210, %v212
    %v214 = vadd.f32 %v213, -0.16666654
    %v215 = vmul.f32 %v210, %v214
    %v216 = vadd.f32 %v215, 1.0
    %v217 = vmul.f32 %v216, %v201
    %vm218 = vweird.f32 %v74
    %v219 = vadd.s32 %v202, 3
    %v220 = vand.u32 %v219, 3
    %vm221 = vcmp.lt.s32.totalorder %v220, 2
    %vm222 = vcmp.eq.s32.totalorder %v220, 0
    %v223 = vxor.u32 %v217, 2147483648
    %v224 = vsel %vm222, %v209, %v223
    %vm225 = vcmp.eq.s32.totalorder %v220, 2
    %v226 = vxor.u32 %v209, 2147483648
    %v227 = vsel %vm225, %v226, %v217
    %v228 = vsel %vm221, %v224, %v227
    %v229 = vsel %vm218, nan, %v228
    %v230 = vmul.f32 %v73, %v229
    %v231 = vmul.f32 %v73, %v73
    %v232 = vand.u32 2147483647, %v74
    %vm233 = vcmp.le.f32.partialorder %v232, 0.7853982
    %vm234 = vcmp.lt.s32.totalorder %v74, 0
    %v235 = vand.u32 %v74, 2139095040
    %v236 = vshrl.u32 %v235, 23
    %v237 = vsub.s32 %v236, 127
    %v238 = vand.u32 2147483647, %v74
    %v239 = vand.u32 %v238, 8388607
    %v240 = vor.u32 %v239, 8388608
    %v241 = vsub.s32 0, %v240
    %v242 = vadd.s32 %v237, 1
    %vm243 = vcmp.gt.s32.totalorder %v242, 0
    %v244 = vsel %vm243, %v242, 0
    %v245 = vshrl.u32 %v244, 5
    %v246 = vand.u32 %v244, 31
    %v247 = vsub.s32 32, %v246
    %v248 = vshrl.u32 683565275, %v247
    %v249 = vshll.u32 683565275, %v246
    %v250 = vshrl.u32 2475754826, %v247
    %v251 = vor.u32 %v249, %v250
    %v252 = vshll.u32 2475754826, %v246
    %v253 = vshrl.u32 2131351028, %v247
    %v254 = vor.u32 %v252, %v253
    %v255 = vshll.u32 2131351028, %v246
    %v256 = vshrl.u32 2102212464, %v247
    %v257 = vor.u32 %v255, %v256
    %v258 = vshll.u32 2102212464, %v246
    %v259 = vshrl.u32 920167782, %v247
    %v260 = vor.u32 %v258, %v259
    %v261 = vshll.u32 920167782, %v246
    %v262 = vshrl.u32 1326507024, %v247
    %v263 = vor.u32 %v261, %v262
    %vm264 = vcmp.lt.s32.totalorder %v245, 1
    %vm265 = vcmp.lt.s32.totalorder %v245, 2
    %vm266 = vcmp.lt.s32.totalorder %v245, 3
    %vm267 = vcmp.lt.s32.totalorder %v245, 4
    %v268 = vsel %vm264, %v248, %v251
    %v269 = vsel %vm267, %v257, 2102212464
    %v270 = vsel %vm266, %v254, %v269
    %v271 = vsel %vm265, %v268, %v270
    %v272 = vsel %vm264, %v251, %v254
    %v273 = vsel %vm267, %v260, 920167782
    %v274 = vsel %vm266, %v257, %v273
    %v275 = vsel %vm265, %v272, %v274
    %v276 = vsel %vm264, %v254, %v257
    %v277 = vsel %vm267, %v263, 1326507024
    %v278 = vsel %vm266, %v260, %v277
    %v279 = vsel %vm265, %v276, %v278
    %v280 = vshll.u32 %v240, 8
    %v281 = vand.u32 %v280, 65535
    %v282 = vshrl.u32 %v280, 16
    %v283 = vand.u32 %v279, 65535
    %v284 = vshrl.u32 %v279, 16
    %v285 = vmul.u32 %v281, %v283
    %v286 = vmul.u32 %v281, %v284
    %v287 = vmul.u32 %v282, %v283
    %v288 = vmul.u32 %v282, %v284
    %v289 = vshll.u32 %v286, 16
    %v290 = vshrl.u32 %v286, 16
    %v291 = vshll.u32 %v287, 16
    %v292 = vshrl.u32 %v287, 16
    %vm293 = vc.u32 %v285, %v289
    %v294 = vsel %vm293, 1, 0
    %v295 = vadd.s32 %v285, %v289
    %v296 = vadd.s32 %v288, %v294
    %vm297 = vc.u32 %v295, %v291
    %v298 = vsel %vm297, 1, 0
    %v299 = vadd.s32 %v295, %v291
    %v300 = vadd.s32 %v296, %v298
    %v301 = vadd.s32 %v300, %v290
    %v302 = vadd.s32 %v301, %v292
    %v303 = vand.u32 %v280, 65535
    %v304 = vshrl.u32 %v280, 16
    %v305 = vand.u32 %v275, 65535
    %v306 = vshrl.u32 %v275, 16
    %v307 = vmul.u32 %v303, %v305
    %v308 = vmul.u32 %v303, %v306
    %v309 = vmul.u32 %v304, %v305
    %v310 = vmul.u32 %v304, %v306
    %v311 = vshll.u32 %v308, 16
    %v312 = vshrl.u32 %v308, 16
    %v313 = vshll.u32 %v309, 16
    %v314 = vshrl.u32 %v309, 16
    %vm315 = vc.u32 %v307, %v311
    %v316 = vsel %vm315, 1, 0
    %v317 = vadd.s32 %v307, %v311
    %v318 = vadd.s32 %v310, %v316
    %vm319 = vc.u32 %v317, %v313
    %v320 = vsel %vm319, 1, 0
    %v321 = vadd.s32 %v317, %v313
    %v322 = vadd.s32 %v318, %v320
    %v323 = vadd.s32 %v322, %v312
    %v324 = vadd.s32 %v323, %v314
    %v325 = vmul.u32 %v280, %v271
    %v326 = vadd.s32 %v302, %v321
    %vm327 = vc.u32 %v302, %v321
    %v328 = vadd.s32 %v324, 1
    %v329 = vsel %vm327, %v328, %v324
    %v330 = vadd.s32 %v325, %v329
    %v331 = vadd.s32 %v330, 536870912
    %v332 = vshrl.u32 %v331, 30
    %v333 = vshll.u32 %v332, 30
    %v334 = vsub.s32 %v330, %v333
    %vm335 = vcmp.lt.s32.totalorder %v334, 0
    %v336 = vsub.s32 0, %v334
    %v337 = vsel %vm335, %v336, %v334
    %v338 = vclz %v337
    %v339 = vsub.s32 %v338, 2
    %vm340 = vcmp.gt.s32.totalorder 0, %v339
    %v341 = vsel %vm340, 0, %v339
    %v342 = vsub.s32 32, %v341
    %v343 = vshll.u32 %v334, %v341
    %v344 = vshrl.u32 %v326, %v342
    %v345 = vor.u32 %v343, %v344
    %v346 = vsub.s32 4294967266, %v341
    %v347 = vadd.s32 %v346, 127
    %v348 = vshll.u32 %v347, 23
    %v349 = vor.u32 4788187, %v348
    %v350 = vand.u32 2147483647, %v349
    %v352 = vcvt.s32.f32 %v345
    %v353 = vmul.f32 %v352, %v350
    %v354 = vxor.u32 %v353, 2147483648
    %v355 = vsel %vm234, %v354, %v353
    %v356 = vsub.s32 4, %v332
    %v357 = vsel %vm234, %v356, %v332
    %v358 = vsel %vm233, %v74, %v355
    %v359 = vsel %vm233, 0, %v357
    %v360 = vmul.f32 %v358, %v358
    %v361 = vmul.f32 %v360, -0.001358992
    %v362 = vadd.f32 %v361, 0.041655596
    %v363 = vmul.f32 %v360, %v362
    %v364 = vadd.f32 %v363, -0.4999988
    %v365 = vmul.f32 %v360, %v364
    %v366 = vadd.f32 1.0, %v365
    %v367 = vmul.f32 %v358, %v358
    %v368 = vmul.f32 %v367, -0.00019511016
    %v369 = vadd.f32 %v368, 0.008332121
    %v370 = vmul.f32 %v367, %v369
    %v371 = vadd.f32 %v370, -0.16666654
    %v372 = vmul.f32 %v367, %v371
    %v373 = vadd.f32 %v372, 1.0
    %v374 = vmul.f32 %v373, %v358
    %vm375 = vweird.f32 %v74
    %v376 = vand.u32 %v359, 3
    %vm377 = vcmp.lt.s32.totalorder %v376, 2
    %vm378 = vcmp.eq.s32.totalorder %v376, 0
    %v379 = vxor.u32 %v374, 2147483648
    %v380 = vsel %vm378, %v366, %v379
    %vm381 = vcmp.eq.s32.totalorder %v376, 2
    %v382 = vxor.u32 %v366, 2147483648
    %v383 = vsel %vm381, %v382, %v374
    %v384 = vsel %vm377, %v380, %v383
    %v385 = vsel %vm375, nan, %v384
    %v386 = vsub.f32 1.0, %v385
    %v387 = vmul.f32 %v231, %v386
    %v388 = vmul.f32 %v230, %v38
    %v389 = vmul.f32 %v230, %v46
    %v390 = vmul.f32 %v230, %v54
    %v391 = vmul.f32 %v387, %v58
    %v392 = vmul.f32 %v387, %v59
    %v393 = vmul.f32 %v387, %v60
    %v394 = vadd.f32 %v56, %v57
    %v395 = vmul.f32 %v387, %v394
    %v396 = vsub.f32 1.0, %v395
    %v397 = vadd.f32 %v55, %v57
    %v398 = vmul.f32 %v387, %v397
    %v399 = vsub.f32 1.0, %v398
    %v400 = vmul.f32 %v387, %v61
    %v401 = vsub.f32 1.0, %v400
    %v402 = vsub.f32 %v391, %v390
    %v403 = vadd.f32 %v391, %v390
    %v404 = vadd.f32 %v392, %v389
    %v405 = vsub.f32 %v392, %v389
    %v406 = vsub.f32 %v393, %v388
    %v407 = vadd.f32 %v393, %v388
    %v408 = vld [vmem:[%s1] sm:$0xff]
    %s409 = scalar_lea.vmem %s1, %s39
    %v410 = vld [vmem:[%s409] sm:$0xff]
    %s411 = scalar_lea.vmem %s1, %s47
    %v412 = vld [vmem:[%s411] sm:$0xff]
    %v413 = vmul.f32 %v408, %v396
    %v414 = vmul.f32 %v410, %v403
    %v415 = vadd.f32 %v413, %v414
    %v416 = vmul.f32 %v412, %v405
    %v417 = vadd.f32 %v415, %v416
    %418 = vst [vmem:[%s4] sm:$0xff] %v417
    %v419 = vmul.f32 %v408, %v402
    %v420 = vmul.f32 %v410, %v399
    %v421 = vadd.f32 %v419, %v420
    %v422 = vmul.f32 %v412, %v407
    %v423 = vadd.f32 %v421, %v422
    %s424 = scalar_lea.vmem %s4, %s39
    %425 = vst [vmem:[%s424] sm:$0xff] %v423
    %v426 = vmul.f32 %v408, %v404
    %v427 = vmul.f32 %v410, %v406
    %v428 = vadd.f32 %v426, %v427
    %v429 = vmul.f32 %v412, %v401
    %v430 = vadd.f32 %v428, %v429
    %s431 = scalar_lea.vmem %s4, %s47
    %432 = vst [vmem:[%s431] sm:$0xff] %v430
    %s433 = sadd.s32 0, 24
    %s434 = scalar_lea.vmem %s1, %s433
    %v435 = vld [vmem:[%s434] sm:$0xff]
    %s436 = sadd.s32 0, 32
    %s437 = scalar_lea.vmem %s1, %s436
    %v438 = vld [vmem:[%s437] sm:$0xff]
    %s439 = sadd.s32 0, 40
    %s440 = scalar_lea.vmem %s1, %s439
    %v441 = vld [vmem:[%s440] sm:$0xff]
    %v442 = vmul.f32 %v435, %v396
    %v443 = vmul.f32 %v438, %v403
    %v444 = vadd.f32 %v442, %v443
    %v445 = vmul.f32 %v441, %v405
    %v446 = vadd.f32 %v444, %v445
    %s447 = scalar_lea.vmem %s4, %s433
    %448 = vst [vmem:[%s447] sm:$0xff] %v446
    %v449 = vmul.f32 %v435, %v402
    %v450 = vmul.f32 %v438, %v399
    %v451 = vadd.f32 %v449, %v450
    %v452 = vmul.f32 %v441, %v407
    %v453 = vadd.f32 %v451, %v452
    %s454 = scalar_lea.vmem %s4, %s436
    %455 = vst [vmem:[%s454] sm:$0xff] %v453
    %v456 = vmul.f32 %v435, %v404
    %v457 = vmul.f32 %v438, %v406
    %v458 = vadd.f32 %v456, %v457
    %v459 = vmul.f32 %v441, %v401
    %v460 = vadd.f32 %v458, %v459
    %s461 = scalar_lea.vmem %s4, %s439
    %462 = vst [vmem:[%s461] sm:$0xff] %v460
    %s463 = sadd.s32 0, 48
    %s464 = scalar_lea.vmem %s1, %s463
    %v465 = vld [vmem:[%s464] sm:$0xff]
    %s466 = sadd.s32 0, 56
    %s467 = scalar_lea.vmem %s1, %s466
    %v468 = vld [vmem:[%s467] sm:$0xff]
    %s469 = sadd.s32 0, 64
    %s470 = scalar_lea.vmem %s1, %s469
    %v471 = vld [vmem:[%s470] sm:$0xff]
    %v472 = vmul.f32 %v465, %v396
    %v473 = vmul.f32 %v468, %v403
    %v474 = vadd.f32 %v472, %v473
    %v475 = vmul.f32 %v471, %v405
    %v476 = vadd.f32 %v474, %v475
    %s477 = scalar_lea.vmem %s4, %s463
    %478 = vst [vmem:[%s477] sm:$0xff] %v476
    %v479 = vmul.f32 %v465, %v402
    %v480 = vmul.f32 %v468, %v399
    %v481 = vadd.f32 %v479, %v480
    %v482 = vmul.f32 %v471, %v407
    %v483 = vadd.f32 %v481, %v482
    %s484 = scalar_lea.vmem %s4, %s466
    %485 = vst [vmem:[%s484] sm:$0xff] %v483
    %v486 = vmul.f32 %v465, %v404
    %v487 = vmul.f32 %v468, %v406
    %v488 = vadd.f32 %v486, %v487
    %v489 = vmul.f32 %v471, %v401
    %v490 = vadd.f32 %v488, %v489
    %s491 = scalar_lea.vmem %s4, %s469
    %492 = vst [vmem:[%s491] sm:$0xff] %v490
    // Predicated region
    $region22: #{so3_reverse_process.1} parent=1 // pred_check
      _
    $region23: #{so3_reverse_process.1} parent=1 // pred_check_branch
      %494 = sbr.rel (0) target = $region25
    $region24: #{so3_reverse_process.1} parent=1 // pred_region
      _
    $region25: #{so3_reverse_process.1} parent=1 // pred_fallthru
      _
    // Predicated region
    $region26: #{so3_reverse_process.1} parent=1 // pred_check
      _
    $region27: #{so3_reverse_process.1} parent=1 // pred_check_branch
      %496 = sbr.rel (0) target = $region29
    $region28: #{so3_reverse_process.1} parent=1 // pred_region
      _
    $region29: #{so3_reverse_process.1} parent=1 // pred_fallthru
      _
    %497 = vsyncpa [#allocation3], 1

</llo_original>
